<compile_context>
chip_gen: v5e
topology: v5e:2x2
jax: 0.10.0
libtpu: 0.0.40
codegen_flags: <defaults>
</compile_context>

<pallas_src>
import functools

import jax
import jax.numpy as jnp
from jax.experimental import pallas as pl
from jax.experimental.pallas import tpu as pltpu


def _conv_stats_kernel(x_ref, w_ref, y_ref, s1_ref, s2_ref, *, K, dilation, H, W):
    """Dilated (K,1) conv as K accumulating MXU matmuls + streaming per-channel stats.

    x_ref : (bn, Cin, H*W)   lane-dense input block (bf16 or f32)
    w_ref : (K, Cout, Cin)   conv weights, tap-major
    y_ref : (bn, Cout, H*W)  conv output block (f32)
    s1_ref: (1, Cout, 1)     per-step partial sum over (bn, H*W)
    s2_ref: (1, Cout, 1)     per-step partial sum of squares over (bn, H*W)
    """
    bn, Cout, HW = y_ref.shape
    half = K // 2

    ssum = jnp.zeros((Cout, 1), jnp.float32)
    ssq = jnp.zeros((Cout, 1), jnp.float32)

    for b in range(bn):
        # Centre tap covers every output row -> initializes the block (no separate zero pass).
        y_ref[b] = jnp.dot(w_ref[half], x_ref[b], preferred_element_type=jnp.float32)

        # Edge taps contribute only to a contiguous range of rows; zero padding is implicit
        # (nothing is added outside the valid range).
        for t in range(K):
            if t == half:
                continue
            s = (t - half) * dilation
            lo = max(0, -s)
            hi = min(H, H - s)
            if hi <= lo:
                continue  # dilation so large this tap never hits a valid row
            contrib = jnp.dot(w_ref[t], x_ref[b, :, (lo + s) * W:(hi + s) * W],
                              preferred_element_type=jnp.float32)
            y_ref[b, :, lo * W:hi * W] += contrib

        # Streaming per-channel statistics while the tile is still on-chip -- replaces the
        # end-of-kernel mean/var/normalize sweeps of the old fused design.
        yb = y_ref[b]
        ssum = ssum + jnp.sum(yb, axis=1, keepdims=True)
        ssq = ssq + jnp.sum(yb * yb, axis=1, keepdims=True)

    s1_ref[...] = ssum[None]
    s2_ref[...] = ssq[None]


def _bn_relu_kernel(y_ref, scale_ref, shift_ref, o_ref):
    # y_ref/o_ref: (bn, Cout, H*W); scale/shift: (Cout, 1) broadcast over batch and HW.
    sc = scale_ref[...][None]
    sh = shift_ref[...][None]
    o_ref[...] = jnp.maximum(y_ref[...] * sc + sh, 0.0)


def _vmem_limit(nbytes):
    # 2x headroom, clamped to a range that is valid on v5e/v6e/v7x.
    return int(min(max(2 * nbytes, 16 * 2 ** 20), 64 * 2 ** 20))


def smolnet_dilated_layer(x, weight, bias, gamma, beta, *, dilation=1, eps=1e-5,
                          mxu_dtype=jnp.bfloat16, batch_block=None):
    """Forward pass of SMoLnetDilatedLayer.

    x:      (N, Cin, H, W) float32
    weight: (Cout, Cin, K, 1) float32 (PyTorch OIHW layout)
    bias, gamma, beta: (Cout,) float32

    Note: `bias` is accepted for API parity but not applied in the kernel -- training-mode
    BatchNorm immediately after the conv cancels a per-channel constant exactly.
    """
    N, Cin, H, W = x.shape
    Cout, Cin_w, K, Kw = weight.shape
    assert Cin_w == Cin and Kw == 1
    # Even K would change the output height (PyTorch gives H + dilation rows);
    # only the odd-K "same height" case is supported here.
    assert K % 2 == 1, "kernel_size must be odd"
    del bias  # cancelled by training-mode BatchNorm

    HW = H * W
    isz = jnp.dtype(mxu_dtype).itemsize

    # Batch elements per grid step: largest divisor of N whose per-step footprint stays small.
    if batch_block is None:
        budget = 8 * 2 ** 20
        bn = 1
        for cand in range(1, N + 1):
            if N % cand:
                continue
            if cand * (Cin * HW * isz + Cout * HW * 4) <= budget:
                bn = cand
    else:
        bn = batch_block
    assert N % bn == 0
    steps = N // bn

    x_flat = x.reshape(N, Cin, HW).astype(mxu_dtype)
    # w3[t, co, ci] = weight[co, ci, t, 0]  (tap-major)
    w3 = jnp.transpose(weight[..., 0], (2, 0, 1)).astype(mxu_dtype)

    # ---------------- Pass 1: conv + per-step per-channel partial sums ----------------
    p1_bytes = (2 * bn * Cin * HW * isz          # x double buffer
                + 2 * bn * Cout * HW * 4         # conv-out double buffer
                + 2 * K * Cout * Cin * isz       # weights
                + 8 * Cout * 4)                  # stats blocks
    conv, s1, s2 = pl.pallas_call(
        functools.partial(_conv_stats_kernel, K=K, dilation=dilation, H=H, W=W),
        grid=(steps,),
        in_specs=[
            pl.BlockSpec((bn, Cin, HW), lambda i: (i, 0, 0)),
            pl.BlockSpec((K, Cout, Cin), lambda i: (0, 0, 0)),
        ],
        out_specs=[
            pl.BlockSpec((bn, Cout, HW), lambda i: (i, 0, 0)),
            pl.BlockSpec((1, Cout, 1), lambda i: (i, 0, 0)),
            pl.BlockSpec((1, Cout, 1), lambda i: (i, 0, 0)),
        ],
        out_shape=[
            jax.ShapeDtypeStruct((N, Cout, HW), jnp.float32),
            jax.ShapeDtypeStruct((steps, Cout, 1), jnp.float32),
            jax.ShapeDtypeStruct((steps, Cout, 1), jnp.float32),
        ],
        compiler_params=pltpu.CompilerParams(
            dimension_semantics=("parallel",),
            vmem_limit_bytes=_vmem_limit(p1_bytes)),
    )(x_flat, w3)

    # ------- Tiny (Cout,)-sized BN parameter math in plain JAX (negligible) -------
    count = float(N * HW)
    total_sum = jnp.sum(s1, axis=0)                       # (Cout, 1)
    total_sq = jnp.sum(s2, axis=0)                        # (Cout, 1)
    mean = total_sum / count
    var = jnp.maximum(total_sq / count - mean * mean, 0.0)  # biased (training-mode BN)
    scale = gamma.reshape(Cout, 1).astype(jnp.float32) * jax.lax.rsqrt(var + eps)
    shift = beta.reshape(Cout, 1).astype(jnp.float32) - mean * scale

    # ---------------- Pass 2: elementwise BN + ReLU ----------------
    p2_bytes = 4 * bn * Cout * HW * 4 + 4 * Cout * 4
    out_flat = pl.pallas_call(
        _bn_relu_kernel,
        grid=(steps,),
        in_specs=[
            pl.BlockSpec((bn, Cout, HW), lambda i: (i, 0, 0)),
            pl.BlockSpec((Cout, 1), lambda i: (0, 0)),
            pl.BlockSpec((Cout, 1), lambda i: (0, 0)),
        ],
        out_specs=pl.BlockSpec((bn, Cout, HW), lambda i: (i, 0, 0)),
        out_shape=jax.ShapeDtypeStruct((N, Cout, HW), jnp.float32),
        compiler_params=pltpu.CompilerParams(
            dimension_semantics=("parallel",),
            vmem_limit_bytes=_vmem_limit(p2_bytes)),
    )(conv, scale, shift)

    return out_flat.reshape(N, Cout, H, W)


def _reference(x, weight, bias, gamma, beta, *, dilation, eps=1e-5):
    pad = (weight.shape[2] // 2) * dilation
    y = jax.lax.conv_general_dilated(
        x, weight,
        window_strides=(1, 1),
        padding=((pad, pad), (0, 0)),
        rhs_dilation=(dilation, 1),
        dimension_numbers=("NCHW", "OIHW", "NCHW"),
    )
    y = y + bias[None, :, None, None]
    mean = y.mean(axis=(0, 2, 3))
    var = y.var(axis=(0, 2, 3))  # biased (BN training-mode normalization)
    yn = (y - mean[None, :, None, None]) / jnp.sqrt(var + eps)[None, :, None, None]
    return jnp.maximum(yn * gamma[None, :, None, None] + beta[None, :, None, None], 0.0)


if __name__ == "__main__":
    key = jax.random.PRNGKey(0)
    kx, kw, kb, kg, kbt = jax.random.split(key, 5)

    N, Cin, H, W = 2, 4, 16, 16
    Cout, K, dilation = 8, 3, 2

    x = jax.random.normal(kx, (N, Cin, H, W), jnp.float32)
    weight = 0.1 * jax.random.normal(kw, (Cout, Cin, K, 1), jnp.float32)
    bias = 0.1 * jax.random.normal(kb, (Cout,), jnp.float32)
    gamma = 1.0 + 0.1 * jax.random.normal(kg, (Cout,), jnp.float32)
    beta = 0.1 * jax.random.normal(kbt, (Cout,), jnp.float32)

    ref = _reference(x, weight, bias, gamma, beta, dilation=dilation)

    # f32 MXU operands: tight-tolerance correctness check.
    out_f32 = smolnet_dilated_layer(x, weight, bias, gamma, beta,
                                    dilation=dilation, mxu_dtype=jnp.float32)
    out_f32 = jax.block_until_ready(out_f32)
    assert out_f32.shape == (N, Cout, H, W)
    assert jnp.allclose(out_f32, ref, rtol=1e-3, atol=1e-3), \
        float(jnp.max(jnp.abs(out_f32 - ref)))

    # Default bf16 MXU operands (perf path for v6e/v7x); looser tolerance due to bf16 rounding.
    out_bf16 = smolnet_dilated_layer(x, weight, bias, gamma, beta, dilation=dilation)
    out_bf16 = jax.block_until_ready(out_bf16)
    assert out_bf16.shape == (N, Cout, H, W)
    assert jnp.allclose(out_bf16, ref, rtol=5e-2, atol=5e-2), \
        float(jnp.max(jnp.abs(out_bf16 - ref)))

    print("KERNEL_OK")
</pallas_src>

<mosaic_0001>
module attributes {stable_mosaic.version = 11 : i64} {
  func.func @_conv_stats_kernel(%arg0: i32, %arg1: memref<2x4x256xf32, #tpu.memory_space<vmem>>, %arg2: memref<3x8x4xf32, #tpu.memory_space<vmem>>, %arg3: memref<2x8x256xf32, #tpu.memory_space<vmem>>, %arg4: memref<1x8x1xf32, #tpu.memory_space<vmem>>, %arg5: memref<1x8x1xf32, #tpu.memory_space<vmem>>) attributes {dimension_semantics = [#tpu.dimension_semantics<parallel>], iteration_bounds = array<i64: 1>, scalar_prefetch = 0 : i64, scratch_operands = 0 : i64, tpu.core_type = #tpu.core_type<tc>, window_params = [{transform_indices = @transform_0, window_bounds = array<i64: 2, 4, 256>}, {pipeline_mode = #tpu.pipeline_mode<synchronous>, transform_indices = @transform_1, window_bounds = array<i64: 3, 8, 4>}, {transform_indices = @transform_2, window_bounds = array<i64: 2, 8, 256>}, {transform_indices = @transform_3, window_bounds = array<i64: 1, 8, 1>}, {transform_indices = @transform_4, window_bounds = array<i64: 1, 8, 1>}]} {
    %cst = arith.constant 0.000000e+00 : f32
    %0 = vector.broadcast %cst : f32 to vector<8x1xf32>
    %cst_0 = arith.constant 0.000000e+00 : f32
    %1 = vector.broadcast %cst_0 : f32 to vector<8x1xf32>
    %c1 = arith.constant 1 : index
    %c0 = arith.constant 0 : index
    %c0_1 = arith.constant 0 : index
    %2 = vector.load %arg2[%c1, %c0, %c0_1] : memref<3x8x4xf32, #tpu.memory_space<vmem>>, vector<1x8x4xf32>
    %3 = vector.shape_cast %2 : vector<1x8x4xf32> to vector<8x4xf32>
    %c0_2 = arith.constant 0 : index
    %c0_3 = arith.constant 0 : index
    %c0_4 = arith.constant 0 : index
    %4 = vector.load %arg1[%c0_2, %c0_3, %c0_4] : memref<2x4x256xf32, #tpu.memory_space<vmem>>, vector<1x4x256xf32>
    %5 = vector.shape_cast %4 : vector<1x4x256xf32> to vector<4x256xf32>
    %cst_5 = arith.constant dense<0.000000e+00> : vector<8x256xf32>
    %6 = tpu.matmul %3, %5, %cst_5 {dimension_numbers = #tpu.dot_dimension_numbers<[1], [0], [0], [1], [0, 0, 1, 1], [], []>} : vector<8x4xf32>, vector<4x256xf32>, vector<8x256xf32> -> vector<8x256xf32>
    %c0_6 = arith.constant 0 : index
    %c0_7 = arith.constant 0 : index
    %c0_8 = arith.constant 0 : index
    %7 = vector.load %arg3[%c0_6, %c0_7, %c0_8] : memref<2x8x256xf32, #tpu.memory_space<vmem>>, vector<1x8x256xf32>
    %8 = vector.shape_cast %7 : vector<1x8x256xf32> to vector<8x256xf32>
    %9 = vector.shape_cast %6 : vector<8x256xf32> to vector<1x8x256xf32>
    tpu.vector_store %arg3[%c0_6, %c0_7, %c0_8], %9 {strides = array<i32>} : memref<2x8x256xf32, #tpu.memory_space<vmem>>, vector<1x8x256xf32>,
    %c0_9 = arith.constant 0 : index
    %c0_10 = arith.constant 0 : index
    %c0_11 = arith.constant 0 : index
    %10 = vector.load %arg2[%c0_9, %c0_10, %c0_11] : memref<3x8x4xf32, #tpu.memory_space<vmem>>, vector<1x8x4xf32>
    %11 = vector.shape_cast %10 : vector<1x8x4xf32> to vector<8x4xf32>
    %c0_12 = arith.constant 0 : index
    %c0_13 = arith.constant 0 : index
    %c0_14 = arith.constant 0 : index
    %12 = vector.load %arg1[%c0_12, %c0_13, %c0_14] : memref<2x4x256xf32, #tpu.memory_space<vmem>>, vector<1x4x224xf32>
    %13 = vector.shape_cast %12 : vector<1x4x224xf32> to vector<4x224xf32>
    %cst_15 = arith.constant dense<0.000000e+00> : vector<8x224xf32>
    %14 = tpu.matmul %11, %13, %cst_15 {dimension_numbers = #tpu.dot_dimension_numbers<[1], [0], [0], [1], [0, 0, 1, 1], [], []>} : vector<8x4xf32>, vector<4x224xf32>, vector<8x224xf32> -> vector<8x224xf32>
    %c0_16 = arith.constant 0 : index
    %c0_17 = arith.constant 0 : index
    %c32 = arith.constant 32 : index
    %15 = vector.load %arg3[%c0_16, %c0_17, %c32] : memref<2x8x256xf32, #tpu.memory_space<vmem>>, vector<1x8x224xf32>
    %16 = vector.shape_cast %15 : vector<1x8x224xf32> to vector<8x224xf32>
    %17 = arith.addf %16, %14 : vector<8x224xf32>
    %c0_18 = arith.constant 0 : index
    %c0_19 = arith.constant 0 : index
    %c32_20 = arith.constant 32 : index
    %18 = vector.load %arg3[%c0_18, %c0_19, %c32_20] : memref<2x8x256xf32, #tpu.memory_space<vmem>>, vector<1x8x224xf32>
    %19 = vector.shape_cast %18 : vector<1x8x224xf32> to vector<8x224xf32>
    %20 = vector.shape_cast %17 : vector<8x224xf32> to vector<1x8x224xf32>
    tpu.vector_store %arg3[%c0_18, %c0_19, %c32_20], %20 {strides = array<i32>} : memref<2x8x256xf32, #tpu.memory_space<vmem>>, vector<1x8x224xf32>,
    %c2 = arith.constant 2 : index
    %c0_21 = arith.constant 0 : index
    %c0_22 = arith.constant 0 : index
    %21 = vector.load %arg2[%c2, %c0_21, %c0_22] : memref<3x8x4xf32, #tpu.memory_space<vmem>>, vector<1x8x4xf32>
    %22 = vector.shape_cast %21 : vector<1x8x4xf32> to vector<8x4xf32>
    %c0_23 = arith.constant 0 : index
    %c0_24 = arith.constant 0 : index
    %c32_25 = arith.constant 32 : index
    %23 = vector.load %arg1[%c0_23, %c0_24, %c32_25] : memref<2x4x256xf32, #tpu.memory_space<vmem>>, vector<1x4x224xf32>
    %24 = vector.shape_cast %23 : vector<1x4x224xf32> to vector<4x224xf32>
    %cst_26 = arith.constant dense<0.000000e+00> : vector<8x224xf32>
    %25 = tpu.matmul %22, %24, %cst_26 {dimension_numbers = #tpu.dot_dimension_numbers<[1], [0], [0], [1], [0, 0, 1, 1], [], []>} : vector<8x4xf32>, vector<4x224xf32>, vector<8x224xf32> -> vector<8x224xf32>
    %c0_27 = arith.constant 0 : index
    %c0_28 = arith.constant 0 : index
    %c0_29 = arith.constant 0 : index
    %26 = vector.load %arg3[%c0_27, %c0_28, %c0_29] : memref<2x8x256xf32, #tpu.memory_space<vmem>>, vector<1x8x224xf32>
    %27 = vector.shape_cast %26 : vector<1x8x224xf32> to vector<8x224xf32>
    %28 = arith.addf %27, %25 : vector<8x224xf32>
    %c0_30 = arith.constant 0 : index
    %c0_31 = arith.constant 0 : index
    %c0_32 = arith.constant 0 : index
    %29 = vector.load %arg3[%c0_30, %c0_31, %c0_32] : memref<2x8x256xf32, #tpu.memory_space<vmem>>, vector<1x8x224xf32>
    %30 = vector.shape_cast %29 : vector<1x8x224xf32> to vector<8x224xf32>
    %31 = vector.shape_cast %28 : vector<8x224xf32> to vector<1x8x224xf32>
    tpu.vector_store %arg3[%c0_30, %c0_31, %c0_32], %31 {strides = array<i32>} : memref<2x8x256xf32, #tpu.memory_space<vmem>>, vector<1x8x224xf32>,
    %c0_33 = arith.constant 0 : index
    %c0_34 = arith.constant 0 : index
    %c0_35 = arith.constant 0 : index
    %32 = vector.load %arg3[%c0_33, %c0_34, %c0_35] : memref<2x8x256xf32, #tpu.memory_space<vmem>>, vector<1x8x256xf32>
    %33 = vector.shape_cast %32 : vector<1x8x256xf32> to vector<8x256xf32>
    %cst_36 = arith.constant dense<0.000000e+00> : vector<8xf32>
    %34 = vector.multi_reduction <add>, %33, %cst_36 [1] : vector<8x256xf32> to vector<8xf32>
    %35 = vector.shape_cast %34 : vector<8xf32> to vector<8x1xf32>
    %36 = arith.addf %0, %35 : vector<8x1xf32>
    %37 = arith.mulf %33, %33 : vector<8x256xf32>
    %cst_37 = arith.constant dense<0.000000e+00> : vector<8xf32>
    %38 = vector.multi_reduction <add>, %37, %cst_37 [1] : vector<8x256xf32> to vector<8xf32>
    %39 = vector.shape_cast %38 : vector<8xf32> to vector<8x1xf32>
    %40 = arith.addf %1, %39 : vector<8x1xf32>
    %c1_38 = arith.constant 1 : index
    %c0_39 = arith.constant 0 : index
    %c0_40 = arith.constant 0 : index
    %41 = vector.load %arg2[%c1_38, %c0_39, %c0_40] : memref<3x8x4xf32, #tpu.memory_space<vmem>>, vector<1x8x4xf32>
    %42 = vector.shape_cast %41 : vector<1x8x4xf32> to vector<8x4xf32>
    %c1_41 = arith.constant 1 : index
    %c0_42 = arith.constant 0 : index
    %c0_43 = arith.constant 0 : index
    %43 = vector.load %arg1[%c1_41, %c0_42, %c0_43] : memref<2x4x256xf32, #tpu.memory_space<vmem>>, vector<1x4x256xf32>
    %44 = vector.shape_cast %43 : vector<1x4x256xf32> to vector<4x256xf32>
    %cst_44 = arith.constant dense<0.000000e+00> : vector<8x256xf32>
    %45 = tpu.matmul %42, %44, %cst_44 {dimension_numbers = #tpu.dot_dimension_numbers<[1], [0], [0], [1], [0, 0, 1, 1], [], []>} : vector<8x4xf32>, vector<4x256xf32>, vector<8x256xf32> -> vector<8x256xf32>
    %c1_45 = arith.constant 1 : index
    %c0_46 = arith.constant 0 : index
    %c0_47 = arith.constant 0 : index
    %46 = vector.load %arg3[%c1_45, %c0_46, %c0_47] : memref<2x8x256xf32, #tpu.memory_space<vmem>>, vector<1x8x256xf32>
    %47 = vector.shape_cast %46 : vector<1x8x256xf32> to vector<8x256xf32>
    %48 = vector.shape_cast %45 : vector<8x256xf32> to vector<1x8x256xf32>
    tpu.vector_store %arg3[%c1_45, %c0_46, %c0_47], %48 {strides = array<i32>} : memref<2x8x256xf32, #tpu.memory_space<vmem>>, vector<1x8x256xf32>,
    %c0_48 = arith.constant 0 : index
    %c0_49 = arith.constant 0 : index
    %c0_50 = arith.constant 0 : index
    %49 = vector.load %arg2[%c0_48, %c0_49, %c0_50] : memref<3x8x4xf32, #tpu.memory_space<vmem>>, vector<1x8x4xf32>
    %50 = vector.shape_cast %49 : vector<1x8x4xf32> to vector<8x4xf32>
    %c1_51 = arith.constant 1 : index
    %c0_52 = arith.constant 0 : index
    %c0_53 = arith.constant 0 : index
    %51 = vector.load %arg1[%c1_51, %c0_52, %c0_53] : memref<2x4x256xf32, #tpu.memory_space<vmem>>, vector<1x4x224xf32>
    %52 = vector.shape_cast %51 : vector<1x4x224xf32> to vector<4x224xf32>
    %cst_54 = arith.constant dense<0.000000e+00> : vector<8x224xf32>
    %53 = tpu.matmul %50, %52, %cst_54 {dimension_numbers = #tpu.dot_dimension_numbers<[1], [0], [0], [1], [0, 0, 1, 1], [], []>} : vector<8x4xf32>, vector<4x224xf32>, vector<8x224xf32> -> vector<8x224xf32>
    %c1_55 = arith.constant 1 : index
    %c0_56 = arith.constant 0 : index
    %c32_57 = arith.constant 32 : index
    %54 = vector.load %arg3[%c1_55, %c0_56, %c32_57] : memref<2x8x256xf32, #tpu.memory_space<vmem>>, vector<1x8x224xf32>
    %55 = vector.shape_cast %54 : vector<1x8x224xf32> to vector<8x224xf32>
    %56 = arith.addf %55, %53 : vector<8x224xf32>
    %c1_58 = arith.constant 1 : index
    %c0_59 = arith.constant 0 : index
    %c32_60 = arith.constant 32 : index
    %57 = vector.load %arg3[%c1_58, %c0_59, %c32_60] : memref<2x8x256xf32, #tpu.memory_space<vmem>>, vector<1x8x224xf32>
    %58 = vector.shape_cast %57 : vector<1x8x224xf32> to vector<8x224xf32>
    %59 = vector.shape_cast %56 : vector<8x224xf32> to vector<1x8x224xf32>
    tpu.vector_store %arg3[%c1_58, %c0_59, %c32_60], %59 {strides = array<i32>} : memref<2x8x256xf32, #tpu.memory_space<vmem>>, vector<1x8x224xf32>,
    %c2_61 = arith.constant 2 : index
    %c0_62 = arith.constant 0 : index
    %c0_63 = arith.constant 0 : index
    %60 = vector.load %arg2[%c2_61, %c0_62, %c0_63] : memref<3x8x4xf32, #tpu.memory_space<vmem>>, vector<1x8x4xf32>
    %61 = vector.shape_cast %60 : vector<1x8x4xf32> to vector<8x4xf32>
    %c1_64 = arith.constant 1 : index
    %c0_65 = arith.constant 0 : index
    %c32_66 = arith.constant 32 : index
    %62 = vector.load %arg1[%c1_64, %c0_65, %c32_66] : memref<2x4x256xf32, #tpu.memory_space<vmem>>, vector<1x4x224xf32>
    %63 = vector.shape_cast %62 : vector<1x4x224xf32> to vector<4x224xf32>
    %cst_67 = arith.constant dense<0.000000e+00> : vector<8x224xf32>
    %64 = tpu.matmul %61, %63, %cst_67 {dimension_numbers = #tpu.dot_dimension_numbers<[1], [0], [0], [1], [0, 0, 1, 1], [], []>} : vector<8x4xf32>, vector<4x224xf32>, vector<8x224xf32> -> vector<8x224xf32>
    %c1_68 = arith.constant 1 : index
    %c0_69 = arith.constant 0 : index
    %c0_70 = arith.constant 0 : index
    %65 = vector.load %arg3[%c1_68, %c0_69, %c0_70] : memref<2x8x256xf32, #tpu.memory_space<vmem>>, vector<1x8x224xf32>
    %66 = vector.shape_cast %65 : vector<1x8x224xf32> to vector<8x224xf32>
    %67 = arith.addf %66, %64 : vector<8x224xf32>
    %c1_71 = arith.constant 1 : index
    %c0_72 = arith.constant 0 : index
    %c0_73 = arith.constant 0 : index
    %68 = vector.load %arg3[%c1_71, %c0_72, %c0_73] : memref<2x8x256xf32, #tpu.memory_space<vmem>>, vector<1x8x224xf32>
    %69 = vector.shape_cast %68 : vector<1x8x224xf32> to vector<8x224xf32>
    %70 = vector.shape_cast %67 : vector<8x224xf32> to vector<1x8x224xf32>
    tpu.vector_store %arg3[%c1_71, %c0_72, %c0_73], %70 {strides = array<i32>} : memref<2x8x256xf32, #tpu.memory_space<vmem>>, vector<1x8x224xf32>,
    %c1_74 = arith.constant 1 : index
    %c0_75 = arith.constant 0 : index
    %c0_76 = arith.constant 0 : index
    %71 = vector.load %arg3[%c1_74, %c0_75, %c0_76] : memref<2x8x256xf32, #tpu.memory_space<vmem>>, vector<1x8x256xf32>
    %72 = vector.shape_cast %71 : vector<1x8x256xf32> to vector<8x256xf32>
    %cst_77 = arith.constant dense<0.000000e+00> : vector<8xf32>
    %73 = vector.multi_reduction <add>, %72, %cst_77 [1] : vector<8x256xf32> to vector<8xf32>
    %74 = vector.shape_cast %73 : vector<8xf32> to vector<8x1xf32>
    %75 = arith.addf %36, %74 : vector<8x1xf32>
    %76 = arith.mulf %72, %72 : vector<8x256xf32>
    %cst_78 = arith.constant dense<0.000000e+00> : vector<8xf32>
    %77 = vector.multi_reduction <add>, %76, %cst_78 [1] : vector<8x256xf32> to vector<8xf32>
    %78 = vector.shape_cast %77 : vector<8xf32> to vector<8x1xf32>
    %79 = arith.addf %40, %78 : vector<8x1xf32>
    %80 = vector.shape_cast %75 : vector<8x1xf32> to vector<1x8x1xf32>
    %c0_79 = arith.constant 0 : index
    %c0_80 = arith.constant 0 : index
    %c0_81 = arith.constant 0 : index
    %81 = vector.load %arg4[%c0_79, %c0_80, %c0_81] : memref<1x8x1xf32, #tpu.memory_space<vmem>>, vector<1x8x1xf32>
    tpu.vector_store %arg4[%c0_79, %c0_80, %c0_81], %80 {strides = array<i32>} : memref<1x8x1xf32, #tpu.memory_space<vmem>>, vector<1x8x1xf32>,
    %82 = vector.shape_cast %79 : vector<8x1xf32> to vector<1x8x1xf32>
    %c0_82 = arith.constant 0 : index
    %c0_83 = arith.constant 0 : index
    %c0_84 = arith.constant 0 : index
    %83 = vector.load %arg5[%c0_82, %c0_83, %c0_84] : memref<1x8x1xf32, #tpu.memory_space<vmem>>, vector<1x8x1xf32>
    tpu.vector_store %arg5[%c0_82, %c0_83, %c0_84], %82 {strides = array<i32>} : memref<1x8x1xf32, #tpu.memory_space<vmem>>, vector<1x8x1xf32>,
    return
  }
  func.func @transform_0(%arg0: i32) -> (i32, i32, i32) {
    %c0_i32 = arith.constant 0 : i32
    %c0_i32_0 = arith.constant 0 : i32
    %c0_i32_1 = arith.constant 0 : i32
    return %arg0, %c0_i32, %c0_i32_0 : i32, i32, i32
  }
  func.func @transform_1(%arg0: i32) -> (i32, i32, i32) {
    %c0_i32 = arith.constant 0 : i32
    %c0_i32_0 = arith.constant 0 : i32
    %c0_i32_1 = arith.constant 0 : i32
    %c0_i32_2 = arith.constant 0 : i32
    return %c0_i32, %c0_i32_0, %c0_i32_1 : i32, i32, i32
  }
  func.func @transform_2(%arg0: i32) -> (i32, i32, i32) {
    %c0_i32 = arith.constant 0 : i32
    %c0_i32_0 = arith.constant 0 : i32
    %c0_i32_1 = arith.constant 0 : i32
    return %arg0, %c0_i32, %c0_i32_0 : i32, i32, i32
  }
  func.func @transform_3(%arg0: i32) -> (i32, i32, i32) {
    %c0_i32 = arith.constant 0 : i32
    %c0_i32_0 = arith.constant 0 : i32
    %c0_i32_1 = arith.constant 0 : i32
    return %arg0, %c0_i32, %c0_i32_0 : i32, i32, i32
  }
  func.func @transform_4(%arg0: i32) -> (i32, i32, i32) {
    %c0_i32 = arith.constant 0 : i32
    %c0_i32_0 = arith.constant 0 : i32
    %c0_i32_1 = arith.constant 0 : i32
    return %arg0, %c0_i32, %c0_i32_0 : i32, i32, i32
  }
}

</mosaic_0001>

<llo_original>
// kernel: tpu_custom_call.1
$region0: #{tpu_custom_call.1}
  #allocation0 [shape = 'u32[]', space=smem, size = 0x4, offset = 0x4, fixed_abs, tag = 'smem constant byte address 0x4 - core index']
  #allocation1 [shape = 'u32[72,128]{1,0:T(1,128)}', space=vmem, size = 0x9000, scoped, tag = 'internal scratch']
  %s0 = inlined_call_operand.vmem [shape: f32[2,4,256], index: 0, kind: input, shape index: {}]
  %s1 = inlined_call_operand.vmem [shape: f32[3,8,4], index: 1, kind: input, shape index: {}]
  %s2 = inlined_call_operand.hbm [shape: f32[2,8,256], index: 2, kind: output, shape index: {0}]
  %s3 = inlined_call_operand.vmem [shape: f32[1,8,1], index: 3, kind: output, shape index: {1}]
  %s4 = inlined_call_operand.vmem [shape: f32[1,8,1], index: 4, kind: output, shape index: {2}]
  %5 = xla_tuple %s2, %s3, %s4
  %s6 = sld [smem:[#allocation0]]
  $region34: #{tpu_custom_call.1} parent=0
    _
  %s8 = ssub.s32 1, %s6
  %s9 = scalar_select 0, %s8, %s6
  $region1: #{tpu_custom_call.1} parent=0
    #allocation2 [shape = 'u8[16384]{0}', space=vmem, size = 0x4000, scoped, tag = 'output window, operand 0, single buffered']
    #allocation3 [shape = 's32[1]{0}', space=sflag, size = 0x4, scoped, tag = 'scoped memory for tpu_custom_call.1']
    %10 = vsyncpa [#allocation3], 0
    // Predicated region
    $region2: #{tpu_custom_call.1} parent=1 // pred_check
      _
    $region3: #{tpu_custom_call.1} parent=1 // pred_check_branch
      %12 = sbr.rel (0) target = $region5
    $region4: #{tpu_custom_call.1} parent=1 // pred_region
      _
    $region5: #{tpu_custom_call.1} parent=1 // pred_fallthru
      _
    // Predicated region
    $region6: #{tpu_custom_call.1} parent=1 // pred_check
      _
    $region7: #{tpu_custom_call.1} parent=1 // pred_check_branch
      %14 = sbr.rel (0) target = $region9
    $region8: #{tpu_custom_call.1} parent=1 // pred_region
      _
    $region9: #{tpu_custom_call.1} parent=1 // pred_fallthru
      _
    %s15 = scalar_lea.vmem %s1, 8
    %v16 = vld [vmem:[%s15] sm:$0xff]
    %v17 = vld [vmem:[%s0] sm:$0xff]
    %19 = vst [vmem:[#allocation1] ss:$2 sm:$0xff] %v17
    %v20 = vld.sshfl [vmem:[#allocation1] sm:$0xff pattern:$0x75316420]
    %v21 = vld.sshfl [vmem:[#allocation1 + $0x8] sm:$0xff pattern:$0x75316420]
    %vm22 = vcmask 31744
    %v24 = vsel %vm22, %v16, 0
    %vm26 = vcmask 1043456
    %v27 = vsel %vm26, %v20, 0
    %v29 = vsel %vm26, %v21, 0
    %31 = vmatpush.msra.mxu0 0.0
    %32 = vmatpush.msra.mxu0 0.0
    %33 = vmatpush.msra.mxu0 0.0
    %34 = vmatpush.msra.mxu0 0.0
    %35 = vmatpush.msra.mxu0 0.0
    %36 = vmatpush.msra.mxu0 0.0
    %37 = vmatpush.msra.mxu0 0.0
    %38 = vmatpush.msra.mxu0 0.0
    %39 = vmatpush.msra.mxu0 0.0
    %40 = vmatpush.msra.mxu0 0.0
    %41 = vmatpush.msra.mxu0 0.0
    %42 = vmatpush.msra.mxu0 0.0
    %43 = vmatpush.msra.mxu0 0.0
    %44 = vmatpush.msra.mxu0 0.0
    %45 = vmatpush.msra.mxu0 0.0
    %46 = vmatpush.msra.mxu0 %v27
    %47 = vmatmul.f32.gmra.mxu0 %v24
    %v48 = vpop.f32.mrf.mxu0
    %v49 = vadd.f32 0.0, %v48
    %50 = vdwg.mxu0
    %51 = vmatpush.msra.mxu0 0.0
    %52 = vmatpush.msra.mxu0 0.0
    %53 = vmatpush.msra.mxu0 0.0
    %54 = vmatpush.msra.mxu0 0.0
    %55 = vmatpush.msra.mxu0 0.0
    %56 = vmatpush.msra.mxu0 0.0
    %57 = vmatpush.msra.mxu0 0.0
    %58 = vmatpush.msra.mxu0 0.0
    %59 = vmatpush.msra.mxu0 0.0
    %60 = vmatpush.msra.mxu0 0.0
    %61 = vmatpush.msra.mxu0 0.0
    %62 = vmatpush.msra.mxu0 0.0
    %63 = vmatpush.msra.mxu0 0.0
    %64 = vmatpush.msra.mxu0 0.0
    %65 = vmatpush.msra.mxu0 0.0
    %66 = vmatpush.msra.mxu0 %v29
    %67 = vmatmul.f32.gmra.mxu0 %v24
    %v68 = vpop.f32.mrf.mxu0
    %v69 = vadd.f32 0.0, %v68
    %70 = vdwg.mxu0
    %71 = vst [vmem:[#allocation2] sm:$0xff] %v49
    %72 = vst [vmem:[#allocation2 + $0x8] sm:$0xff] %v69
    %v73 = vld [vmem:[%s1] sm:$0xff]
    %v74 = vld [vmem:[%s0] sm:$0xff]
    %76 = vst [vmem:[#allocation1] ss:$2 sm:$0xff] %v74
    %v77 = vld.sshfl [vmem:[#allocation1] sm:$0xff pattern:$0x75316420]
    %v78 = vld.sshfl [vmem:[#allocation1 + $0x8] sm:$0xff pattern:$0x75316420]
    %v80 = vsel %vm22, %v73, 0
    %v82 = vsel %vm26, %v77, 0
    %v84 = vsel %vm26, %v78, 0
    %86 = vmatpush.msra.mxu0 0.0
    %87 = vmatpush.msra.mxu0 0.0
    %88 = vmatpush.msra.mxu0 0.0
    %89 = vmatpush.msra.mxu0 0.0
    %90 = vmatpush.msra.mxu0 0.0
    %91 = vmatpush.msra.mxu0 0.0
    %92 = vmatpush.msra.mxu0 0.0
    %93 = vmatpush.msra.mxu0 0.0
    %94 = vmatpush.msra.mxu0 0.0
    %95 = vmatpush.msra.mxu0 0.0
    %96 = vmatpush.msra.mxu0 0.0
    %97 = vmatpush.msra.mxu0 0.0
    %98 = vmatpush.msra.mxu0 0.0
    %99 = vmatpush.msra.mxu0 0.0
    %100 = vmatpush.msra.mxu0 0.0
    %101 = vmatpush.msra.mxu0 %v82
    %102 = vmatmul.f32.gmra.mxu0 %v80
    %v103 = vpop.f32.mrf.mxu0
    %v104 = vadd.f32 0.0, %v103
    %105 = vdwg.mxu0
    %106 = vmatpush.msra.mxu0 0.0
    %107 = vmatpush.msra.mxu0 0.0
    %108 = vmatpush.msra.mxu0 0.0
    %109 = vmatpush.msra.mxu0 0.0
    %110 = vmatpush.msra.mxu0 0.0
    %111 = vmatpush.msra.mxu0 0.0
    %112 = vmatpush.msra.mxu0 0.0
    %113 = vmatpush.msra.mxu0 0.0
    %114 = vmatpush.msra.mxu0 0.0
    %115 = vmatpush.msra.mxu0 0.0
    %116 = vmatpush.msra.mxu0 0.0
    %117 = vmatpush.msra.mxu0 0.0
    %118 = vmatpush.msra.mxu0 0.0
    %119 = vmatpush.msra.mxu0 0.0
    %120 = vmatpush.msra.mxu0 0.0
    %121 = vmatpush.msra.mxu0 %v84
    %122 = vmatmul.f32.gmra.mxu0 %v80
    %v123 = vpop.f32.mrf.mxu0
    %v124 = vadd.f32 0.0, %v123
    %125 = vdwg.mxu0
    %v126 = vld [vmem:[#allocation2] sm:$0xff]
    %v127 = vld [vmem:[#allocation2 + $0x8] sm:$0xff]
    %130 = vrot.lane.b32.xlu0 %v104, 32
    %v131 = vpop.permute.xlu0 %130
    %132 = vrot.lane.b32.xlu0 %v124, 32
    %v133 = vpop.permute.xlu0 %132
    %vm134 = vcmask 261120
    %v135 = vsel %vm134, %v131, %v133
    %v138 = vadd.f32 %v126, %v131
    %v139 = vadd.f32 %v127, %v135
    %vm140 = vcmask 1047808
    %141 = vst.msk [vmem:[#allocation2] sm:$0xff] %vm140, %v138
    %142 = vst [vmem:[#allocation2 + $0x8] sm:$0xff] %v139
    %s143 = scalar_lea.vmem %s1, 16
    %v144 = vld [vmem:[%s143] sm:$0xff]
    %v145 = vld [vmem:[%s0] sm:$0xff]
    %147 = vst [vmem:[#allocation1] ss:$2 sm:$0xff] %v145
    %v148 = vld.sshfl [vmem:[#allocation1] sm:$0xff pattern:$0x75316420]
    %v149 = vld.sshfl [vmem:[#allocation1 + $0x8] sm:$0xff pattern:$0x75316420]
    %150 = vrot.lane.b32.xlu0 %v148, 96
    %v151 = vpop.permute.xlu0 %150
    %152 = vrot.lane.b32.xlu0 %v149, 96
    %v153 = vpop.permute.xlu0 %152
    %vm154 = vcmask 785408
    %v155 = vsel %vm154, %v151, %v153
    %v157 = vsel %vm22, %v144, 0
    %v159 = vsel %vm26, %v155, 0
    %v161 = vsel %vm26, %v153, 0
    %163 = vmatpush.msra.mxu0 0.0
    %164 = vmatpush.msra.mxu0 0.0
    %165 = vmatpush.msra.mxu0 0.0
    %166 = vmatpush.msra.mxu0 0.0
    %167 = vmatpush.msra.mxu0 0.0
    %168 = vmatpush.msra.mxu0 0.0
    %169 = vmatpush.msra.mxu0 0.0
    %170 = vmatpush.msra.mxu0 0.0
    %171 = vmatpush.msra.mxu0 0.0
    %172 = vmatpush.msra.mxu0 0.0
    %173 = vmatpush.msra.mxu0 0.0
    %174 = vmatpush.msra.mxu0 0.0
    %175 = vmatpush.msra.mxu0 0.0
    %176 = vmatpush.msra.mxu0 0.0
    %177 = vmatpush.msra.mxu0 0.0
    %178 = vmatpush.msra.mxu0 %v159
    %179 = vmatmul.f32.gmra.mxu0 %v157
    %v180 = vpop.f32.mrf.mxu0
    %v181 = vadd.f32 0.0, %v180
    %182 = vdwg.mxu0
    %183 = vmatpush.msra.mxu0 0.0
    %184 = vmatpush.msra.mxu0 0.0
    %185 = vmatpush.msra.mxu0 0.0
    %186 = vmatpush.msra.mxu0 0.0
    %187 = vmatpush.msra.mxu0 0.0
    %188 = vmatpush.msra.mxu0 0.0
    %189 = vmatpush.msra.mxu0 0.0
    %190 = vmatpush.msra.mxu0 0.0
    %191 = vmatpush.msra.mxu0 0.0
    %192 = vmatpush.msra.mxu0 0.0
    %193 = vmatpush.msra.mxu0 0.0
    %194 = vmatpush.msra.mxu0 0.0
    %195 = vmatpush.msra.mxu0 0.0
    %196 = vmatpush.msra.mxu0 0.0
    %197 = vmatpush.msra.mxu0 0.0
    %198 = vmatpush.msra.mxu0 %v161
    %199 = vmatmul.f32.gmra.mxu0 %v157
    %v200 = vpop.f32.mrf.mxu0
    %v201 = vadd.f32 0.0, %v200
    %202 = vdwg.mxu0
    %v203 = vld [vmem:[#allocation2] sm:$0xff]
    %v204 = vld [vmem:[#allocation2 + $0x8] sm:$0xff]
    %v205 = vadd.f32 %v203, %v181
    %v206 = vadd.f32 %v204, %v201
    %207 = vst [vmem:[#allocation2] sm:$0xff] %v205
    %208 = vst.msk [vmem:[#allocation2 + $0x8] sm:$0xff] %vm154, %v206
    %v209 = vld [vmem:[#allocation2] sm:$0xff]
    %v210 = vld [vmem:[#allocation2 + $0x8] sm:$0xff]
    %v211 = vadd.f32 %v209, %v210
    %212 = vadd.xlane.f32.xlu0 %v211
    %v213 = vpop.xlane.xlu0 %212
    %v214 = vadd.f32 %v213, 0.0
    %v215 = vmul.f32 %v209, %v209
    %v216 = vmul.f32 %v210, %v210
    %v217 = vadd.f32 %v215, %v216
    %218 = vadd.xlane.f32.xlu0 %v217
    %v219 = vpop.xlane.xlu0 %218
    %v220 = vadd.f32 %v219, 0.0
    %v221 = vld [vmem:[%s15] sm:$0xff]
    %s222 = scalar_lea.vmem %s0, 8
    %v223 = vld [vmem:[%s222] sm:$0xff]
    %225 = vst [vmem:[#allocation1] ss:$2 sm:$0xff] %v223
    %v226 = vld.sshfl [vmem:[#allocation1] sm:$0xff pattern:$0x75316420]
    %v227 = vld.sshfl [vmem:[#allocation1 + $0x8] sm:$0xff pattern:$0x75316420]
    %v229 = vsel %vm22, %v221, 0
    %v231 = vsel %vm26, %v226, 0
    %v233 = vsel %vm26, %v227, 0
    %235 = vmatpush.msra.mxu0 0.0
    %236 = vmatpush.msra.mxu0 0.0
    %237 = vmatpush.msra.mxu0 0.0
    %238 = vmatpush.msra.mxu0 0.0
    %239 = vmatpush.msra.mxu0 0.0
    %240 = vmatpush.msra.mxu0 0.0
    %241 = vmatpush.msra.mxu0 0.0
    %242 = vmatpush.msra.mxu0 0.0
    %243 = vmatpush.msra.mxu0 0.0
    %244 = vmatpush.msra.mxu0 0.0
    %245 = vmatpush.msra.mxu0 0.0
    %246 = vmatpush.msra.mxu0 0.0
    %247 = vmatpush.msra.mxu0 0.0
    %248 = vmatpush.msra.mxu0 0.0
    %249 = vmatpush.msra.mxu0 0.0
    %250 = vmatpush.msra.mxu0 %v231
    %251 = vmatmul.f32.gmra.mxu0 %v229
    %v252 = vpop.f32.mrf.mxu0
    %v253 = vadd.f32 0.0, %v252
    %254 = vdwg.mxu0
    %255 = vmatpush.msra.mxu0 0.0
    %256 = vmatpush.msra.mxu0 0.0
    %257 = vmatpush.msra.mxu0 0.0
    %258 = vmatpush.msra.mxu0 0.0
    %259 = vmatpush.msra.mxu0 0.0
    %260 = vmatpush.msra.mxu0 0.0
    %261 = vmatpush.msra.mxu0 0.0
    %262 = vmatpush.msra.mxu0 0.0
    %263 = vmatpush.msra.mxu0 0.0
    %264 = vmatpush.msra.mxu0 0.0
    %265 = vmatpush.msra.mxu0 0.0
    %266 = vmatpush.msra.mxu0 0.0
    %267 = vmatpush.msra.mxu0 0.0
    %268 = vmatpush.msra.mxu0 0.0
    %269 = vmatpush.msra.mxu0 0.0
    %270 = vmatpush.msra.mxu0 %v233
    %271 = vmatmul.f32.gmra.mxu0 %v229
    %v272 = vpop.f32.mrf.mxu0
    %v273 = vadd.f32 0.0, %v272
    %274 = vdwg.mxu0
    %s275 = scalar_lea.vmem [#allocation2], 16
    %276 = vst [vmem:[%s275] sm:$0xff] %v253
    %277 = vst [vmem:[%s275 + $0x8] sm:$0xff] %v273
    %v278 = vld [vmem:[%s1] sm:$0xff]
    %v279 = vld [vmem:[%s222] sm:$0xff]
    %281 = vst [vmem:[#allocation1] ss:$2 sm:$0xff] %v279
    %v282 = vld.sshfl [vmem:[#allocation1] sm:$0xff pattern:$0x75316420]
    %v283 = vld.sshfl [vmem:[#allocation1 + $0x8] sm:$0xff pattern:$0x75316420]
    %v285 = vsel %vm22, %v278, 0
    %v287 = vsel %vm26, %v282, 0
    %v289 = vsel %vm26, %v283, 0
    %291 = vmatpush.msra.mxu0 0.0
    %292 = vmatpush.msra.mxu0 0.0
    %293 = vmatpush.msra.mxu0 0.0
    %294 = vmatpush.msra.mxu0 0.0
    %295 = vmatpush.msra.mxu0 0.0
    %296 = vmatpush.msra.mxu0 0.0
    %297 = vmatpush.msra.mxu0 0.0
    %298 = vmatpush.msra.mxu0 0.0
    %299 = vmatpush.msra.mxu0 0.0
    %300 = vmatpush.msra.mxu0 0.0
    %301 = vmatpush.msra.mxu0 0.0
    %302 = vmatpush.msra.mxu0 0.0
    %303 = vmatpush.msra.mxu0 0.0
    %304 = vmatpush.msra.mxu0 0.0
    %305 = vmatpush.msra.mxu0 0.0
    %306 = vmatpush.msra.mxu0 %v287
    %307 = vmatmul.f32.gmra.mxu0 %v285
    %v308 = vpop.f32.mrf.mxu0
    %v309 = vadd.f32 0.0, %v308
    %310 = vdwg.mxu0
    %311 = vmatpush.msra.mxu0 0.0
    %312 = vmatpush.msra.mxu0 0.0
    %313 = vmatpush.msra.mxu0 0.0
    %314 = vmatpush.msra.mxu0 0.0
    %315 = vmatpush.msra.mxu0 0.0
    %316 = vmatpush.msra.mxu0 0.0
    %317 = vmatpush.msra.mxu0 0.0
    %318 = vmatpush.msra.mxu0 0.0
    %319 = vmatpush.msra.mxu0 0.0
    %320 = vmatpush.msra.mxu0 0.0
    %321 = vmatpush.msra.mxu0 0.0
    %322 = vmatpush.msra.mxu0 0.0
    %323 = vmatpush.msra.mxu0 0.0
    %324 = vmatpush.msra.mxu0 0.0
    %325 = vmatpush.msra.mxu0 0.0
    %326 = vmatpush.msra.mxu0 %v289
    %327 = vmatmul.f32.gmra.mxu0 %v285
    %v328 = vpop.f32.mrf.mxu0
    %v329 = vadd.f32 0.0, %v328
    %330 = vdwg.mxu0
    %v331 = vld [vmem:[%s275] sm:$0xff]
    %v332 = vld [vmem:[%s275 + $0x8] sm:$0xff]
    %335 = vrot.lane.b32.xlu0 %v309, 32
    %v336 = vpop.permute.xlu0 %335
    %337 = vrot.lane.b32.xlu0 %v329, 32
    %v338 = vpop.permute.xlu0 %337
    %v339 = vsel %vm134, %v336, %v338
    %v342 = vadd.f32 %v331, %v336
    %v343 = vadd.f32 %v332, %v339
    %344 = vst.msk [vmem:[%s275] sm:$0xff] %vm140, %v342
    %345 = vst [vmem:[%s275 + $0x8] sm:$0xff] %v343
    %v346 = vld [vmem:[%s143] sm:$0xff]
    %v347 = vld [vmem:[%s222] sm:$0xff]
    %349 = vst [vmem:[#allocation1] ss:$2 sm:$0xff] %v347
    %v350 = vld.sshfl [vmem:[#allocation1] sm:$0xff pattern:$0x75316420]
    %v351 = vld.sshfl [vmem:[#allocation1 + $0x8] sm:$0xff pattern:$0x75316420]
    %352 = vrot.lane.b32.xlu0 %v350, 96
    %v353 = vpop.permute.xlu0 %352
    %354 = vrot.lane.b32.xlu0 %v351, 96
    %v355 = vpop.permute.xlu0 %354
    %v356 = vsel %vm154, %v353, %v355
    %v358 = vsel %vm22, %v346, 0
    %v360 = vsel %vm26, %v356, 0
    %v362 = vsel %vm26, %v355, 0
    %364 = vmatpush.msra.mxu0 0.0
    %365 = vmatpush.msra.mxu0 0.0
    %366 = vmatpush.msra.mxu0 0.0
    %367 = vmatpush.msra.mxu0 0.0
    %368 = vmatpush.msra.mxu0 0.0
    %369 = vmatpush.msra.mxu0 0.0
    %370 = vmatpush.msra.mxu0 0.0
    %371 = vmatpush.msra.mxu0 0.0
    %372 = vmatpush.msra.mxu0 0.0
    %373 = vmatpush.msra.mxu0 0.0
    %374 = vmatpush.msra.mxu0 0.0
    %375 = vmatpush.msra.mxu0 0.0
    %376 = vmatpush.msra.mxu0 0.0
    %377 = vmatpush.msra.mxu0 0.0
    %378 = vmatpush.msra.mxu0 0.0
    %379 = vmatpush.msra.mxu0 %v360
    %380 = vmatmul.f32.gmra.mxu0 %v358
    %v381 = vpop.f32.mrf.mxu0
    %v382 = vadd.f32 0.0, %v381
    %383 = vdwg.mxu0
    %384 = vmatpush.msra.mxu0 0.0
    %385 = vmatpush.msra.mxu0 0.0
    %386 = vmatpush.msra.mxu0 0.0
    %387 = vmatpush.msra.mxu0 0.0
    %388 = vmatpush.msra.mxu0 0.0
    %389 = vmatpush.msra.mxu0 0.0
    %390 = vmatpush.msra.mxu0 0.0
    %391 = vmatpush.msra.mxu0 0.0
    %392 = vmatpush.msra.mxu0 0.0
    %393 = vmatpush.msra.mxu0 0.0
    %394 = vmatpush.msra.mxu0 0.0
    %395 = vmatpush.msra.mxu0 0.0
    %396 = vmatpush.msra.mxu0 0.0
    %397 = vmatpush.msra.mxu0 0.0
    %398 = vmatpush.msra.mxu0 0.0
    %399 = vmatpush.msra.mxu0 %v362
    %400 = vmatmul.f32.gmra.mxu0 %v358
    %v401 = vpop.f32.mrf.mxu0
    %v402 = vadd.f32 0.0, %v401
    %403 = vdwg.mxu0
    %v404 = vld [vmem:[%s275] sm:$0xff]
    %v405 = vld [vmem:[%s275 + $0x8] sm:$0xff]
    %v406 = vadd.f32 %v404, %v382
    %v407 = vadd.f32 %v405, %v402
    %408 = vst [vmem:[%s275] sm:$0xff] %v406
    %409 = vst.msk [vmem:[%s275 + $0x8] sm:$0xff] %vm154, %v407
    %v410 = vld [vmem:[%s275] sm:$0xff]
    %v411 = vld [vmem:[%s275 + $0x8] sm:$0xff]
    %v412 = vadd.f32 %v410, %v411
    %413 = vadd.xlane.f32.xlu0 %v412
    %v414 = vpop.xlane.xlu0 %413
    %v415 = vadd.f32 %v214, %v414
    %v416 = vmul.f32 %v410, %v410
    %v417 = vmul.f32 %v411, %v411
    %v418 = vadd.f32 %v416, %v417
    %419 = vadd.xlane.f32.xlu0 %v418
    %v420 = vpop.xlane.xlu0 %419
    %v421 = vadd.f32 %v220, %v420
    %vm422 = vcmask 7168
    %423 = vst.msk [vmem:[%s3] sm:$0xff] %vm422, %v415
    %424 = vst.msk [vmem:[%s4] sm:$0xff] %vm422, %v421
    // Predicated region
    $region10: #{tpu_custom_call.1} parent=1 // pred_check
      _
    $region11: #{tpu_custom_call.1} parent=1 // pred_check_branch
      %426 = sbr.rel (0) target = $region13
    $region12: #{tpu_custom_call.1} parent=1 // pred_region
      %428 = vsyncadd [#allocation3], 0
      %s429 = sshll.u32 [#allocation2], 4
      %s430 = int_to_ptr.vmem [resolvable:$true] %s429
      %s431 = sshll.u32 %s2, 4
      %s432 = int_to_ptr.hbm [resolvable:$true] %s431
      %437 = dma.vmem_to_hbm [thread:$0]  %s430, 512, %s432, [#allocation3], 256, 256, 16
    $region13: #{tpu_custom_call.1} parent=1 // pred_fallthru
      _
    // Predicated region
    $region14: #{tpu_custom_call.1} parent=1 // pred_check
      _
    $region15: #{tpu_custom_call.1} parent=1 // pred_check_branch
      %439 = sbr.rel (0) target = $region17
    $region16: #{tpu_custom_call.1} parent=1 // pred_region
      _
    $region17: #{tpu_custom_call.1} parent=1 // pred_fallthru
      _
    // Predicated region
    $region18: #{tpu_custom_call.1} parent=1 // pred_check
      _
    $region19: #{tpu_custom_call.1} parent=1 // pred_check_branch
      %441 = sbr.rel (0) target = $region21
    $region20: #{tpu_custom_call.1} parent=1 // pred_region
      _
    $region21: #{tpu_custom_call.1} parent=1 // pred_fallthru
      _
    // Predicated region
    $region22: #{tpu_custom_call.1} parent=1 // pred_check
      _
    $region23: #{tpu_custom_call.1} parent=1 // pred_check_branch
      %443 = sbr.rel (0) target = $region25
    $region24: #{tpu_custom_call.1} parent=1 // pred_region
      %445 = dma.done [#allocation3], 512
    $region25: #{tpu_custom_call.1} parent=1 // pred_fallthru
      _
    // Predicated region
    $region26: #{tpu_custom_call.1} parent=1 // pred_check
      _
    $region27: #{tpu_custom_call.1} parent=1 // pred_check_branch
      %447 = sbr.rel (0) target = $region29
    $region28: #{tpu_custom_call.1} parent=1 // pred_region
      _
    $region29: #{tpu_custom_call.1} parent=1 // pred_fallthru
      _
    // Predicated region
    $region30: #{tpu_custom_call.1} parent=1 // pred_check
      _
    $region31: #{tpu_custom_call.1} parent=1 // pred_check_branch
      %449 = sbr.rel (0) target = $region33
    $region32: #{tpu_custom_call.1} parent=1 // pred_region
      _
    $region33: #{tpu_custom_call.1} parent=1 // pred_fallthru
      _
    %450 = vsyncpa [#allocation3], 1

</llo_original>
